<compile_context>
chip_gen: v6e
topology: v6e:2x2x1
jax: 0.10.0
libtpu: 0.0.40
codegen_flags: <defaults>
</compile_context>

<pallas_src>
import jax
import jax.numpy as jnp
from jax.experimental import pallas as pl
from jax.experimental.pallas import tpu as pltpu


def _round_up(x, m):
    return ((x + m - 1) // m) * m


def _mlp_kernel(x_ref, w1_ref, b1_ref, w2_ref, b2_ref, o_ref):
    # linear1: x @ W1^T + b1   (W1 pre-transposed to [in_f, hid_p], bf16)
    xb = x_ref[...].astype(jnp.bfloat16)
    h = jnp.dot(xb, w1_ref[...], preferred_element_type=jnp.float32)
    h = jnp.maximum(h + b1_ref[...], 0.0)          # f32 bias + ReLU: VPU filler
    # linear2: h @ W2^T + b2   (lane-dense nc_p output -> unmasked stores)
    out = jnp.dot(h.astype(jnp.bfloat16), w2_ref[...],
                  preferred_element_type=jnp.float32)
    o_ref[...] = (out + b2_ref[...]).astype(o_ref.dtype)


def prepare_params(w1, b1, w2, b2):
    """One-time (init) parameter prep.

    PyTorch nn.Linear layout in:  w1 [hidden, in], b1 [hidden],
                                  w2 [num_classes, hidden], b2 [num_classes].
    Produces matmul-layout, lane-padded, bf16 weights. K (= in_features) is
    deliberately NOT padded so x never needs a wrapper-side padding copy.
    """
    hidden, in_f = w1.shape
    nc = w2.shape[0]
    hid_p = _round_up(hidden, 128)
    nc_p = _round_up(nc, 128)

    w1_p = jnp.zeros((in_f, hid_p), jnp.bfloat16).at[:, :hidden].set(
        w1.T.astype(jnp.bfloat16))
    b1_p = jnp.zeros((1, hid_p), jnp.float32).at[0, :hidden].set(b1)
    w2_p = jnp.zeros((hid_p, nc_p), jnp.bfloat16).at[:hidden, :nc].set(
        w2.T.astype(jnp.bfloat16))
    b2_p = jnp.zeros((1, nc_p), jnp.float32).at[0, :nc].set(b2)
    return w1_p, b1_p, w2_p, b2_p, (in_f, hidden, nc)


_SINGLE_CALL_MAX_ROWS = 256       # above this, tile the batch (and megacore-split)
_TB_CAP = 2048                    # max rows per batch tile
_TILE_VMEM_BUDGET = 24 << 20      # bytes reserved for (double-buffered) row tiles


def neural_net2_forward(x, params):
    """x: [B, in_features] f32. Returns logits [B, num_classes] f32."""
    w1_p, b1_p, w2_p, b2_p, (in_f, hidden, nc) = params
    hid_p = w1_p.shape[1]
    nc_p = w2_p.shape[1]
    B = x.shape[0]
    assert x.shape[1] == in_f, (x.shape, in_f)

    out_shape = jax.ShapeDtypeStruct((B, nc_p), jnp.float32)

    if B <= _SINGLE_CALL_MAX_ROWS:
        # Small batch: single call, whole-array VMEM blocks, no pipelining.
        out_p = pl.pallas_call(
            _mlp_kernel,
            out_shape=out_shape,
            in_specs=[pl.BlockSpec(memory_space=pltpu.MemorySpace.VMEM)] * 5,
            out_specs=pl.BlockSpec(memory_space=pltpu.MemorySpace.VMEM),
        )(x, w1_p, b1_p, w2_p, b2_p)
    else:
        # Per-row VMEM footprint: double-buffered x/out HBM tiles plus
        # in-kernel temporaries (bf16 x copy, f32 h, bf16 h).
        bytes_per_row = (2 * in_f * 4 + 2 * nc_p * 4
                         + in_f * 2 + hid_p * 4 + hid_p * 2)
        tb_cap = (_TILE_VMEM_BUDGET // bytes_per_row) // 8 * 8
        tb_cap = max(8, min(_TB_CAP, tb_cap))

        # >= 2 and even tile count so v7x's two TensorCores split the
        # "parallel" batch axis evenly; TB sized from B so awkward batch
        # sizes aren't padded up to the cap.
        num_tiles = max(2, pl.cdiv(B, tb_cap))
        if num_tiles % 2:
            num_tiles += 1
        TB = _round_up(pl.cdiv(B, num_tiles), 8)
        grid = (pl.cdiv(B, TB),)   # ragged last tile: OOB rows masked on store

        weight_bytes = 2 * (w1_p.size * 2 + w2_p.size * 2
                            + b1_p.size * 4 + b2_p.size * 4)  # double-buffered
        vmem_limit = int(min(48 << 20,
                             max(32 << 20,
                                 2 * (TB * bytes_per_row + weight_bytes))))

        out_p = pl.pallas_call(
            _mlp_kernel,
            out_shape=out_shape,
            grid=grid,
            in_specs=[
                pl.BlockSpec((TB, in_f), lambda i: (i, 0)),      # x row tile
                pl.BlockSpec((in_f, hid_p), lambda i: (0, 0)),   # resident W1
                pl.BlockSpec((1, hid_p), lambda i: (0, 0)),      # resident b1
                pl.BlockSpec((hid_p, nc_p), lambda i: (0, 0)),   # resident W2
                pl.BlockSpec((1, nc_p), lambda i: (0, 0)),       # resident b2
            ],
            out_specs=pl.BlockSpec((TB, nc_p), lambda i: (i, 0)),
            compiler_params=pltpu.CompilerParams(
                dimension_semantics=("parallel",),
                vmem_limit_bytes=vmem_limit,
            ),
        )(x, w1_p, b1_p, w2_p, b2_p)

    # Padded logit columns nc..nc_p are exactly 0.0 (not -inf); safe only
    # because of this slice.
    # TODO(synk): fuse the class mask / log-softmax-CE downstream and return
    # the padded (B, nc_p) block directly to save this extra HBM pass.
    return out_p[:, :nc]


def _reference(x, w1, b1, w2, b2):
    h = jnp.maximum(x @ w1.T + b1, 0.0)
    return h @ w2.T + b2


if __name__ == "__main__":
    input_size, hidden_size, num_classes = 32, 32, 3

    key = jax.random.PRNGKey(0)
    kx, kw1, kb1, kw2, kb2, kx2 = jax.random.split(key, 6)

    # Deterministic synthetic parameters (PyTorch nn.Linear shapes).
    w1 = jax.random.normal(kw1, (hidden_size, input_size), jnp.float32) * 0.1
    b1 = jax.random.normal(kb1, (hidden_size,), jnp.float32) * 0.1
    w2 = jax.random.normal(kw2, (num_classes, hidden_size), jnp.float32) * 0.1
    b2 = jax.random.normal(kb2, (num_classes,), jnp.float32) * 0.1
    params = prepare_params(w1, b1, w2, b2)   # one-time init-side prep

    # Tolerance is 1e-2 (not 1e-5) because matmul operands are bf16 on the MXU.
    # Small batch -> single whole-array call.
    x = jax.random.normal(kx, (8, input_size), dtype=jnp.float32)
    y = jax.block_until_ready(neural_net2_forward(x, params))
    y_ref = _reference(x, w1, b1, w2, b2)
    assert y.shape == (8, num_classes), y.shape
    assert jnp.allclose(y, y_ref, atol=1e-2, rtol=1e-2), "small-batch mismatch"

    # Larger batch -> tiled grid path (ragged last tile, batch-parallel grid).
    x_big = jax.random.normal(kx2, (300, input_size), dtype=jnp.float32)
    y_big = jax.block_until_ready(neural_net2_forward(x_big, params))
    y_big_ref = _reference(x_big, w1, b1, w2, b2)
    assert y_big.shape == (300, num_classes), y_big.shape
    assert jnp.allclose(y_big, y_big_ref, atol=1e-2, rtol=1e-2), "grid-path mismatch"

    print("KERNEL_OK")
</pallas_src>

<mosaic_0001>
module attributes {stable_mosaic.version = 11 : i64} {
  func.func @_mlp_kernel(%arg0: memref<8x32xf32, #tpu.memory_space<vmem>>, %arg1: memref<32x128xbf16, #tpu.memory_space<vmem>>, %arg2: memref<1x128xf32, #tpu.memory_space<vmem>>, %arg3: memref<128x128xbf16, #tpu.memory_space<vmem>>, %arg4: memref<1x128xf32, #tpu.memory_space<vmem>>, %arg5: memref<8x128xf32, #tpu.memory_space<vmem>>) attributes {dimension_semantics = [], scalar_prefetch = 0 : i64, scratch_operands = 0 : i64, tpu.core_type = #tpu.core_type<tc>} {
    %c0 = arith.constant 0 : index
    %c0_0 = arith.constant 0 : index
    %0 = vector.load %arg0[%c0, %c0_0] : memref<8x32xf32, #tpu.memory_space<vmem>>, vector<8x32xf32>
    %1 = arith.truncf %0 : vector<8x32xf32> to vector<8x32xbf16>
    %c0_1 = arith.constant 0 : index
    %c0_2 = arith.constant 0 : index
    %2 = vector.load %arg1[%c0_1, %c0_2] : memref<32x128xbf16, #tpu.memory_space<vmem>>, vector<32x128xbf16>
    %cst = arith.constant dense<0.000000e+00> : vector<8x128xf32>
    %3 = tpu.matmul %1, %2, %cst {dimension_numbers = #tpu.dot_dimension_numbers<[1], [0], [0], [1], [0, 0, 1, 1], [], []>} : vector<8x32xbf16>, vector<32x128xbf16>, vector<8x128xf32> -> vector<8x128xf32>
    %c0_3 = arith.constant 0 : index
    %c0_4 = arith.constant 0 : index
    %4 = vector.load %arg2[%c0_3, %c0_4] : memref<1x128xf32, #tpu.memory_space<vmem>>, vector<1x128xf32>
    %5 = vector.broadcast %4 : vector<1x128xf32> to vector<8x128xf32>
    %6 = arith.addf %3, %5 : vector<8x128xf32>
    %cst_5 = arith.constant 0.000000e+00 : f32
    %7 = vector.broadcast %cst_5 : f32 to vector<8x128xf32>
    %8 = arith.maximumf %6, %7 : vector<8x128xf32>
    %9 = arith.truncf %8 : vector<8x128xf32> to vector<8x128xbf16>
    %c0_6 = arith.constant 0 : index
    %c0_7 = arith.constant 0 : index
    %10 = vector.load %arg3[%c0_6, %c0_7] : memref<128x128xbf16, #tpu.memory_space<vmem>>, vector<128x128xbf16>
    %cst_8 = arith.constant dense<0.000000e+00> : vector<8x128xf32>
    %11 = tpu.matmul %9, %10, %cst_8 {dimension_numbers = #tpu.dot_dimension_numbers<[1], [0], [0], [1], [0, 0, 1, 1], [], []>} : vector<8x128xbf16>, vector<128x128xbf16>, vector<8x128xf32> -> vector<8x128xf32>
    %c0_9 = arith.constant 0 : index
    %c0_10 = arith.constant 0 : index
    %12 = vector.load %arg4[%c0_9, %c0_10] : memref<1x128xf32, #tpu.memory_space<vmem>>, vector<1x128xf32>
    %13 = vector.broadcast %12 : vector<1x128xf32> to vector<8x128xf32>
    %14 = arith.addf %11, %13 : vector<8x128xf32>
    %c0_11 = arith.constant 0 : index
    %c0_12 = arith.constant 0 : index
    %15 = vector.load %arg5[%c0_11, %c0_12] : memref<8x128xf32, #tpu.memory_space<vmem>>, vector<8x128xf32>
    tpu.vector_store %arg5[%c0_11, %c0_12], %14 {strides = array<i32>} : memref<8x128xf32, #tpu.memory_space<vmem>>, vector<8x128xf32>,
    return
  }
}

</mosaic_0001>

<llo_original>
// kernel: tpu_custom_call.1
$region0: #{tpu_custom_call.1}
  #allocation0 [shape = 'u32[]', space=smem, size = 0x4, offset = 0x4, fixed_abs, tag = 'smem constant byte address 0x4 - core index']
  #allocation1 [shape = 'u32[144,128]{1,0:T(1,128)}', space=vmem, size = 0x12000, scoped, tag = 'internal scratch']
  %s0 = inlined_call_operand.hbm [shape: f32[8,32], index: 0, kind: input, shape index: {}]
  %s1 = inlined_call_operand.hbm [shape: bf16[32,128], index: 1, kind: input, shape index: {}]
  %s2 = inlined_call_operand.vmem [shape: f32[1,128], index: 2, kind: input, shape index: {}]
  %s3 = inlined_call_operand.hbm [shape: bf16[128,128], index: 3, kind: input, shape index: {}]
  %s4 = inlined_call_operand.vmem [shape: f32[1,128], index: 4, kind: input, shape index: {}]
  %s5 = inlined_call_operand.hbm [shape: f32[8,128], index: 5, kind: output, shape index: {}]
  %s6 = sld [smem:[#allocation0]]
  $region42: #{tpu_custom_call.1} parent=0
    _
  %s8 = ssub.s32 1, %s6
  %s9 = scalar_select 0, %s8, %s6
  $region1: #{tpu_custom_call.1} parent=0
    #allocation2 [shape = 'u8[4096]{0}', space=vmem, size = 0x1000, scoped, tag = 'input window, operand 0, single buffered']
    #allocation3 [shape = 's32[1]{0}', space=sflag, size = 0x4, scoped, tag = 'scoped memory for tpu_custom_call.1']
    #allocation4 [shape = 's32[1]{0}', space=sflag, size = 0x4, scoped, tag = 'scoped memory for tpu_custom_call.1']
    #allocation5 [shape = 'u8[8192]{0}', space=vmem, size = 0x2000, scoped, tag = 'input window, operand 1, single buffered']
    #allocation6 [shape = 's32[1]{0}', space=sflag, size = 0x4, scoped, tag = 'scoped memory for tpu_custom_call.1']
    #allocation7 [shape = 'u8[32768]{0}', space=vmem, size = 0x8000, scoped, tag = 'input window, operand 3, single buffered']
    #allocation8 [shape = 'u8[4096]{0}', space=vmem, size = 0x1000, scoped, tag = 'output window, operand 0, single buffered']
    %10 = vsyncpa [#allocation3], 0
    %11 = vsyncpa [#allocation6], 0
    %12 = vsyncpa [#allocation4], 0
    // Predicated region
    $region2: #{tpu_custom_call.1} parent=1 // pred_check
      _
    $region3: #{tpu_custom_call.1} parent=1 // pred_check_branch
      %14 = sbr.rel (0) target = $region5
    $region4: #{tpu_custom_call.1} parent=1 // pred_region
      %s16 = ssub.s32 128, 128
      %17 = vsyncadd [#allocation3], %s16
      %s19 = sshll.u32 [#allocation2], 4
      %s20 = int_to_ptr.vmem [resolvable:$true] %s19
      %22 = dma.hbm_to_vmem [thread:$0]  %s0, 128, %s20, [#allocation3]
    $region5: #{tpu_custom_call.1} parent=1 // pred_fallthru
      _
    // Predicated region
    $region6: #{tpu_custom_call.1} parent=1 // pred_check
      _
    $region7: #{tpu_custom_call.1} parent=1 // pred_check_branch
      %24 = sbr.rel (0) target = $region9
    $region8: #{tpu_custom_call.1} parent=1 // pred_region
      %s26 = ssub.s32 256, 256
      %27 = vsyncadd [#allocation6], %s26
      %s28 = sshll.u32 [#allocation5], 4
      %s29 = int_to_ptr.vmem [resolvable:$true] %s28
      %34 = dma.hbm_to_vmem [thread:$0]  %s1, 256, %s29, [#allocation6], 64, 64, 4
    $region9: #{tpu_custom_call.1} parent=1 // pred_fallthru
      _
    // Predicated region
    $region10: #{tpu_custom_call.1} parent=1 // pred_check
      _
    $region11: #{tpu_custom_call.1} parent=1 // pred_check_branch
      %36 = sbr.rel (0) target = $region13
    $region12: #{tpu_custom_call.1} parent=1 // pred_region
      _
    $region13: #{tpu_custom_call.1} parent=1 // pred_fallthru
      _
    // Predicated region
    $region14: #{tpu_custom_call.1} parent=1 // pred_check
      _
    $region15: #{tpu_custom_call.1} parent=1 // pred_check_branch
      %38 = sbr.rel (0) target = $region17
    $region16: #{tpu_custom_call.1} parent=1 // pred_region
      %s40 = ssub.s32 1024, 1024
      %41 = vsyncadd [#allocation6], %s40
      %s42 = sshll.u32 [#allocation7], 4
      %s43 = int_to_ptr.vmem [resolvable:$true] %s42
      %48 = dma.hbm_to_vmem [thread:$0]  %s3, 1024, %s43, [#allocation6], 64, 64, 4
    $region17: #{tpu_custom_call.1} parent=1 // pred_fallthru
      _
    // Predicated region
    $region18: #{tpu_custom_call.1} parent=1 // pred_check
      _
    $region19: #{tpu_custom_call.1} parent=1 // pred_check_branch
      %50 = sbr.rel (0) target = $region21
    $region20: #{tpu_custom_call.1} parent=1 // pred_region
      _
    $region21: #{tpu_custom_call.1} parent=1 // pred_fallthru
      _
    // Predicated region
    $region22: #{tpu_custom_call.1} parent=1 // pred_check
      _
    $region23: #{tpu_custom_call.1} parent=1 // pred_check_branch
      %52 = sbr.rel (0) target = $region25
    $region24: #{tpu_custom_call.1} parent=1 // pred_region
      %53 = dma.done [#allocation3], 128
    $region25: #{tpu_custom_call.1} parent=1 // pred_fallthru
      _
    // Predicated region
    $region26: #{tpu_custom_call.1} parent=1 // pred_check
      _
    $region27: #{tpu_custom_call.1} parent=1 // pred_check_branch
      %55 = sbr.rel (0) target = $region29
    $region28: #{tpu_custom_call.1} parent=1 // pred_region
      %56 = dma.done [#allocation6], 256
    $region29: #{tpu_custom_call.1} parent=1 // pred_fallthru
      _
    // Predicated region
    $region30: #{tpu_custom_call.1} parent=1 // pred_check
      _
    $region31: #{tpu_custom_call.1} parent=1 // pred_check_branch
      %58 = sbr.rel (0) target = $region33
    $region32: #{tpu_custom_call.1} parent=1 // pred_region
      %59 = dma.done [#allocation6], 1024
    $region33: #{tpu_custom_call.1} parent=1 // pred_fallthru
      _
    %v61 = vld [vmem:[#allocation2] sm:$0xff]
    %v62 = vpack.c.bf16 %v61, %v61
    %v63 = vld [vmem:[#allocation5] sm:$0xf]
    %v64 = vld [vmem:[#allocation5 + $0x4] sm:$0xf]
    %v65 = vld [vmem:[#allocation5 + $0x8] sm:$0xf]
    %v66 = vld [vmem:[#allocation5 + $0xc] sm:$0xf]
    %v67 = vld [vmem:[%s2] sm:$0x1]
    %v69 = vlaneseq
    %v70 = vshrl.u32 %v69, 7
    %v71 = vsub.s32 0, %v70
    %v72 = vrot.slane %v67, %v71
    %v78 = vunpack.c.l.b16 %v63
    %v79 = vunpack.c.l.b16 %v64
    %v80 = vunpack.c.l.b16 %v65
    %v81 = vunpack.c.l.b16 %v66
    %v82 = vpack.c.b16 %v79, %v78
    %v83 = vpack.c.b16 %v81, %v80
    %vm86 = vcmask 261120
    %v88 = vsel %vm86, %v62, 0
    %90 = vmatprep.subr.bf16.mxu0 0
    %91 = vmatpush1.bf16.msra.mxu0 0
    %92 = vmatprep.subr.bf16.mxu0 0
    %93 = vmatpush1.bf16.msra.mxu0 0
    %94 = vmatprep.subr.bf16.mxu0 0
    %95 = vmatpush1.bf16.msra.mxu0 0
    %96 = vmatprep.subr.bf16.mxu0 0
    %97 = vmatpush1.bf16.msra.mxu0 0
    %98 = vmatprep.subr.bf16.mxu0 0
    %99 = vmatpush1.bf16.msra.mxu0 0
    %100 = vmatprep.subr.bf16.mxu0 0
    %101 = vmatpush1.bf16.msra.mxu0 0
    %102 = vmatprep.subr.bf16.mxu0 0
    %103 = vmatpush1.bf16.msra.mxu0 %v83
    %104 = vmatprep.subr.bf16.mxu0 0
    %105 = vmatpush1.bf16.msra.mxu0 %v82
    %106 = vmatprep.subr.bf16.mxu0 0
    %107 = vmatpush2.bf16.msra.mxu0 0
    %108 = vmatprep.subr.bf16.mxu0 0
    %109 = vmatpush2.bf16.msra.mxu0 0
    %110 = vmatprep.subr.bf16.mxu0 0
    %111 = vmatpush2.bf16.msra.mxu0 0
    %112 = vmatprep.subr.bf16.mxu0 0
    %113 = vmatpush2.bf16.msra.mxu0 0
    %114 = vmatprep.subr.bf16.mxu0 0
    %115 = vmatpush2.bf16.msra.mxu0 0
    %116 = vmatprep.subr.bf16.mxu0 0
    %117 = vmatpush2.bf16.msra.mxu0 0
    %118 = vmatprep.subr.bf16.mxu0 0
    %119 = vmatpush2.bf16.msra.mxu0 0
    %120 = vmatprep.subr.bf16.mxu0 0
    %121 = vmatpush2.bf16.msra.mxu0 0
    %122 = vmatprep.mubr.bf16.mxu0 0
    %123 = vmatmul.mubr.bf16.gmra.mxu0 %v88
    %v124 = vpop.f32.mrf.mxu0
    %v125 = vadd.f32 %v72, %v124
    %v126 = vpop.f32.mrf.mxu0
    %v127 = vpop.f32.mrf.mxu0
    %v128 = vpop.f32.mrf.mxu0
    %129 = vdwg.mxu0
    %v130 = vmax.f32 %v125, 0.0
    %v131 = vpack.c.bf16 %v130, %v130
    %v132 = vld [vmem:[#allocation7] sm:$0xf]
    %v133 = vld [vmem:[#allocation7 + $0x4] sm:$0xf]
    %v134 = vld [vmem:[#allocation7 + $0x8] sm:$0xf]
    %v135 = vld [vmem:[#allocation7 + $0xc] sm:$0xf]
    %v136 = vld [vmem:[#allocation7 + $0x10] sm:$0xf]
    %v137 = vld [vmem:[#allocation7 + $0x14] sm:$0xf]
    %v138 = vld [vmem:[#allocation7 + $0x18] sm:$0xf]
    %v139 = vld [vmem:[#allocation7 + $0x1c] sm:$0xf]
    %v140 = vld [vmem:[#allocation7 + $0x20] sm:$0xf]
    %v141 = vld [vmem:[#allocation7 + $0x24] sm:$0xf]
    %v142 = vld [vmem:[#allocation7 + $0x28] sm:$0xf]
    %v143 = vld [vmem:[#allocation7 + $0x2c] sm:$0xf]
    %v144 = vld [vmem:[#allocation7 + $0x30] sm:$0xf]
    %v145 = vld [vmem:[#allocation7 + $0x34] sm:$0xf]
    %v146 = vld [vmem:[#allocation7 + $0x38] sm:$0xf]
    %v147 = vld [vmem:[#allocation7 + $0x3c] sm:$0xf]
    %v148 = vld [vmem:[%s4] sm:$0x1]
    %v150 = vlaneseq
    %v151 = vshrl.u32 %v150, 7
    %v152 = vsub.s32 0, %v151
    %v153 = vrot.slane %v148, %v152
    %v171 = vunpack.c.l.b16 %v132
    %v172 = vunpack.c.l.b16 %v133
    %v173 = vunpack.c.l.b16 %v134
    %v174 = vunpack.c.l.b16 %v135
    %v175 = vunpack.c.l.b16 %v136
    %v176 = vunpack.c.l.b16 %v137
    %v177 = vunpack.c.l.b16 %v138
    %v178 = vunpack.c.l.b16 %v139
    %v179 = vunpack.c.l.b16 %v140
    %v180 = vunpack.c.l.b16 %v141
    %v181 = vunpack.c.l.b16 %v142
    %v182 = vunpack.c.l.b16 %v143
    %v183 = vunpack.c.l.b16 %v144
    %v184 = vunpack.c.l.b16 %v145
    %v185 = vunpack.c.l.b16 %v146
    %v186 = vunpack.c.l.b16 %v147
    %v187 = vpack.c.b16 %v172, %v171
    %v188 = vpack.c.b16 %v174, %v173
    %v189 = vpack.c.b16 %v176, %v175
    %v190 = vpack.c.b16 %v178, %v177
    %v191 = vpack.c.b16 %v180, %v179
    %v192 = vpack.c.b16 %v182, %v181
    %v193 = vpack.c.b16 %v184, %v183
    %v194 = vpack.c.b16 %v186, %v185
    %203 = vmatprep.subr.bf16.mxu0 0
    %204 = vmatpush1.bf16.msra.mxu0 %v194
    %205 = vmatprep.subr.bf16.mxu0 0
    %206 = vmatpush1.bf16.msra.mxu0 %v193
    %207 = vmatprep.subr.bf16.mxu0 0
    %208 = vmatpush1.bf16.msra.mxu0 %v192
    %209 = vmatprep.subr.bf16.mxu0 0
    %210 = vmatpush1.bf16.msra.mxu0 %v191
    %211 = vmatprep.subr.bf16.mxu0 0
    %212 = vmatpush1.bf16.msra.mxu0 %v190
    %213 = vmatprep.subr.bf16.mxu0 0
    %214 = vmatpush1.bf16.msra.mxu0 %v189
    %215 = vmatprep.subr.bf16.mxu0 0
    %216 = vmatpush1.bf16.msra.mxu0 %v188
    %217 = vmatprep.subr.bf16.mxu0 0
    %218 = vmatpush1.bf16.msra.mxu0 %v187
    %219 = vmatprep.subr.bf16.mxu0 0
    %220 = vmatpush2.bf16.msra.mxu0 0
    %221 = vmatprep.subr.bf16.mxu0 0
    %222 = vmatpush2.bf16.msra.mxu0 0
    %223 = vmatprep.subr.bf16.mxu0 0
    %224 = vmatpush2.bf16.msra.mxu0 0
    %225 = vmatprep.subr.bf16.mxu0 0
    %226 = vmatpush2.bf16.msra.mxu0 0
    %227 = vmatprep.subr.bf16.mxu0 0
    %228 = vmatpush2.bf16.msra.mxu0 0
    %229 = vmatprep.subr.bf16.mxu0 0
    %230 = vmatpush2.bf16.msra.mxu0 0
    %231 = vmatprep.subr.bf16.mxu0 0
    %232 = vmatpush2.bf16.msra.mxu0 0
    %233 = vmatprep.subr.bf16.mxu0 0
    %234 = vmatpush2.bf16.msra.mxu0 0
    %235 = vmatprep.mubr.bf16.mxu0 0
    %236 = vmatmul.mubr.bf16.gmra.mxu0 %v131
    %v237 = vpop.f32.mrf.mxu0
    %v238 = vadd.f32 %v153, %v237
    %v239 = vpop.f32.mrf.mxu0
    %v240 = vpop.f32.mrf.mxu0
    %v241 = vpop.f32.mrf.mxu0
    %242 = vdwg.mxu0
    %243 = vst [vmem:[#allocation8] sm:$0xff] %v238
    // Predicated region
    $region34: #{tpu_custom_call.1} parent=1 // pred_check
      _
    $region35: #{tpu_custom_call.1} parent=1 // pred_check_branch
      %245 = sbr.rel (0) target = $region37
    $region36: #{tpu_custom_call.1} parent=1 // pred_region
      %s247 = ssub.s32 128, 128
      %248 = vsyncadd [#allocation4], %s247
      %s250 = sshll.u32 [#allocation8], 4
      %s251 = int_to_ptr.vmem [resolvable:$true] %s250
      %253 = dma.vmem_to_hbm [thread:$0]  %s251, 128, %s5, [#allocation4]
    $region37: #{tpu_custom_call.1} parent=1 // pred_fallthru
      _
    // Predicated region
    $region38: #{tpu_custom_call.1} parent=1 // pred_check
      _
    $region39: #{tpu_custom_call.1} parent=1 // pred_check_branch
      %255 = sbr.rel (0) target = $region41
    $region40: #{tpu_custom_call.1} parent=1 // pred_region
      %256 = dma.done [#allocation4], 128
    $region41: #{tpu_custom_call.1} parent=1 // pred_fallthru
      _
    %257 = vsyncpa [#allocation3], 1
    %258 = vsyncpa [#allocation6], 1
    %259 = vsyncpa [#allocation4], 1

</llo_original>
